<compile_context>
chip_gen: v6e
topology: v6e:2x2x1
jax: 0.10.0
libtpu: 0.0.40
codegen_flags: <defaults>
</compile_context>

<pallas_src>
import functools

import jax
import jax.numpy as jnp
from jax.experimental import pallas as pl
from jax.experimental.pallas import tpu as pltpu

INPUT_DIM = 10
HIDDEN_DIMS = [64, 32, 16]
OUTPUT_DIM = 2
OUTPUT_PAD = 128          # lane-dense padded output width
DROPOUT_RATE = 0.1
BN_EPS = 1e-5


def _round_up(x, m):
    return ((x + m - 1) // m) * m


def deep_mlp_kernel(
    x_ref,
    w1_ref, b1_ref,
    w2_ref, b2_ref,
    w3_ref, b3_ref,
    w4_ref, b4_ref,
    o_ref,
):
    h = x_ref[...]
    # BN scale/shift and Linear bias are pre-folded into wN/bN.
    h = jnp.maximum(
        jnp.dot(h, w1_ref[...], preferred_element_type=jnp.float32) + b1_ref[...], 0.0)
    h = jnp.maximum(
        jnp.dot(h, w2_ref[...], preferred_element_type=jnp.float32) + b2_ref[...], 0.0)
    h = jnp.maximum(
        jnp.dot(h, w3_ref[...], preferred_element_type=jnp.float32) + b3_ref[...], 0.0)
    # Output layer, zero-padded to 128 lanes (wrapper slices back to OUTPUT_DIM).
    o_ref[...] = (
        jnp.dot(h, w4_ref[...], preferred_element_type=jnp.float32) + b4_ref[...])


def xavier_uniform(key, fan_out, fan_in):
    # matches torch.nn.init.xavier_uniform_ for a [out, in] weight
    bound = jnp.sqrt(6.0 / (fan_in + fan_out))
    return jax.random.uniform(key, (fan_out, fan_in), jnp.float32, -bound, bound)


def build_raw_params(key):
    """PyTorch-style parameters mirroring DeepMLP.__init__/_init_weights."""
    dims = [INPUT_DIM] + HIDDEN_DIMS
    keys = jax.random.split(key, len(HIDDEN_DIMS) + 1)
    layers = []
    for i, (din, dout) in enumerate(zip(dims[:-1], dims[1:])):
        w = xavier_uniform(keys[i], dout, din)            # [out, in]
        b = jnp.zeros((dout,), jnp.float32)
        # fresh BatchNorm1d state: gamma=1, beta=0, running_mean=0, running_var=1
        gamma = jnp.ones((dout,), jnp.float32)
        beta = jnp.zeros((dout,), jnp.float32)
        rmean = jnp.zeros((dout,), jnp.float32)
        rvar = jnp.ones((dout,), jnp.float32)
        layers.append((w, b, gamma, beta, rmean, rvar))
    w_out = xavier_uniform(keys[-1], OUTPUT_DIM, dims[-1])  # [out, in]
    b_out = jnp.zeros((OUTPUT_DIM,), jnp.float32)
    return layers, (w_out, b_out)


def fold_params(raw_params):
    """Fold BN(eval) scale/shift + Linear bias into [in, out] weights/biases.

    relu(((x @ w.T + b) - rm) / sqrt(rv+eps) * g + beta)
      == relu(x @ (w.T * s) + (b * s + t)),  s = g / sqrt(rv+eps), t = beta - rm*s
    """
    layers, (w_out, b_out) = raw_params
    folded = []
    for (w, b, gamma, beta, rmean, rvar) in layers:
        scale = gamma / jnp.sqrt(rvar + BN_EPS)
        shift = beta - rmean * scale
        wf = w.T * scale[None, :]                         # [in, out]
        bf = (b * scale + shift).reshape(1, -1)           # [1, out]
        folded.extend([wf, bf])
    # lane-dense padded output layer: [in, 128], [1, 128]
    w4 = jnp.zeros((w_out.shape[1], OUTPUT_PAD), jnp.float32)
    w4 = w4.at[:, :OUTPUT_DIM].set(w_out.T)
    b4 = jnp.zeros((1, OUTPUT_PAD), jnp.float32)
    b4 = b4.at[0, :OUTPUT_DIM].set(b_out)
    folded.extend([w4, b4])
    return folded


@functools.partial(jax.jit, static_argnames=("tile_batch",))
def deep_mlp_forward(x, folded_params, tile_batch=1024):
    B = x.shape[0]
    # Tile choice: single grid step for small batches, capped tile for large
    # batches (VMEM-safe on v7x, amortizes per-grid-step overhead elsewhere).
    TB = min(tile_batch, _round_up(B, 8))
    padded_B = _round_up(B, TB)
    if padded_B != B:
        x = jnp.pad(x, ((0, padded_B - B), (0, 0)))
    num_tiles = padded_B // TB

    x_spec = pl.BlockSpec((TB, INPUT_DIM), lambda i: (i, 0))
    out_spec = pl.BlockSpec((TB, OUTPUT_PAD), lambda i: (i, 0))
    # weights/biases stay VMEM-resident across the batch grid
    param_specs = [pl.BlockSpec(p.shape, lambda i: (0, 0)) for p in folded_params]

    dims = [INPUT_DIM] + HIDDEN_DIMS + [OUTPUT_PAD]
    flops = 2 * padded_B * sum(a * b for a, b in zip(dims[:-1], dims[1:]))
    param_bytes = sum(int(p.size) * 4 for p in folded_params)
    bytes_accessed = 4 * padded_B * (INPUT_DIM + OUTPUT_PAD) + param_bytes

    out = pl.pallas_call(
        deep_mlp_kernel,
        out_shape=jax.ShapeDtypeStruct((padded_B, OUTPUT_PAD), jnp.float32),
        grid=(num_tiles,),
        in_specs=[x_spec] + param_specs,
        out_specs=out_spec,
        compiler_params=pltpu.CompilerParams(
            dimension_semantics=("parallel",)),
        cost_estimate=pl.CostEstimate(
            flops=flops, transcendentals=0, bytes_accessed=bytes_accessed),
    )(x, *folded_params)

    return out[:B, :OUTPUT_DIM]


def deep_mlp_reference(x, raw_params):
    """Pure-JAX reference with the original (unfolded) module semantics."""
    layers, (w_out, b_out) = raw_params
    h = x
    for (w, b, gamma, beta, rmean, rvar) in layers:
        h = h @ w.T + b                                   # Linear
        h = (h - rmean) / jnp.sqrt(rvar + BN_EPS) * gamma + beta  # BatchNorm1d eval
        h = jnp.maximum(h, 0.0)                           # ReLU (Dropout = identity)
    return h @ w_out.T + b_out


if __name__ == "__main__":
    key = jax.random.PRNGKey(0)
    key_x, key_p = jax.random.split(key)

    batch = 8
    x = jax.random.normal(key_x, (batch, INPUT_DIM), jnp.float32)

    raw_params = build_raw_params(key_p)
    folded_params = fold_params(raw_params)

    out = deep_mlp_forward(x, folded_params)
    out = jax.block_until_ready(out)

    ref = deep_mlp_reference(x, raw_params)
    assert out.shape == (batch, OUTPUT_DIM)
    assert jnp.allclose(out, ref, atol=1e-5, rtol=1e-5)

    print("KERNEL_OK")
</pallas_src>

<mosaic_0001>
module attributes {stable_mosaic.version = 11 : i64} {
  func.func @deep_mlp_kernel(%arg0: i32, %arg1: memref<8x10xf32, #tpu.memory_space<vmem>>, %arg2: memref<10x64xf32, #tpu.memory_space<vmem>>, %arg3: memref<1x64xf32, #tpu.memory_space<vmem>>, %arg4: memref<64x32xf32, #tpu.memory_space<vmem>>, %arg5: memref<1x32xf32, #tpu.memory_space<vmem>>, %arg6: memref<32x16xf32, #tpu.memory_space<vmem>>, %arg7: memref<1x16xf32, #tpu.memory_space<vmem>>, %arg8: memref<16x128xf32, #tpu.memory_space<vmem>>, %arg9: memref<1x128xf32, #tpu.memory_space<vmem>>, %arg10: memref<8x128xf32, #tpu.memory_space<vmem>>) attributes {dimension_semantics = [#tpu.dimension_semantics<parallel>], iteration_bounds = array<i64: 1>, scalar_prefetch = 0 : i64, scratch_operands = 0 : i64, tpu.core_type = #tpu.core_type<tc>, window_params = [{transform_indices = @transform_0, window_bounds = array<i64: 8, 10>}, {pipeline_mode = #tpu.pipeline_mode<synchronous>, transform_indices = @transform_1, window_bounds = array<i64: 10, 64>}, {pipeline_mode = #tpu.pipeline_mode<synchronous>, transform_indices = @transform_2, window_bounds = array<i64: 1, 64>}, {pipeline_mode = #tpu.pipeline_mode<synchronous>, transform_indices = @transform_3, window_bounds = array<i64: 64, 32>}, {pipeline_mode = #tpu.pipeline_mode<synchronous>, transform_indices = @transform_4, window_bounds = array<i64: 1, 32>}, {pipeline_mode = #tpu.pipeline_mode<synchronous>, transform_indices = @transform_5, window_bounds = array<i64: 32, 16>}, {pipeline_mode = #tpu.pipeline_mode<synchronous>, transform_indices = @transform_6, window_bounds = array<i64: 1, 16>}, {pipeline_mode = #tpu.pipeline_mode<synchronous>, transform_indices = @transform_7, window_bounds = array<i64: 16, 128>}, {pipeline_mode = #tpu.pipeline_mode<synchronous>, transform_indices = @transform_8, window_bounds = array<i64: 1, 128>}, {transform_indices = @transform_9, window_bounds = array<i64: 8, 128>}]} {
    %c0 = arith.constant 0 : index
    %c0_0 = arith.constant 0 : index
    %0 = vector.load %arg1[%c0, %c0_0] : memref<8x10xf32, #tpu.memory_space<vmem>>, vector<8x10xf32>
    %c0_1 = arith.constant 0 : index
    %c0_2 = arith.constant 0 : index
    %1 = vector.load %arg2[%c0_1, %c0_2] : memref<10x64xf32, #tpu.memory_space<vmem>>, vector<10x64xf32>
    %cst = arith.constant dense<0.000000e+00> : vector<8x64xf32>
    %2 = tpu.matmul %0, %1, %cst {dimension_numbers = #tpu.dot_dimension_numbers<[1], [0], [0], [1], [0, 0, 1, 1], [], []>} : vector<8x10xf32>, vector<10x64xf32>, vector<8x64xf32> -> vector<8x64xf32>
    %c0_3 = arith.constant 0 : index
    %c0_4 = arith.constant 0 : index
    %3 = vector.load %arg3[%c0_3, %c0_4] : memref<1x64xf32, #tpu.memory_space<vmem>>, vector<1x64xf32>
    %4 = vector.broadcast %3 : vector<1x64xf32> to vector<8x64xf32>
    %5 = arith.addf %2, %4 : vector<8x64xf32>
    %cst_5 = arith.constant 0.000000e+00 : f32
    %6 = vector.broadcast %cst_5 : f32 to vector<8x64xf32>
    %7 = arith.maximumf %5, %6 : vector<8x64xf32>
    %c0_6 = arith.constant 0 : index
    %c0_7 = arith.constant 0 : index
    %8 = vector.load %arg4[%c0_6, %c0_7] : memref<64x32xf32, #tpu.memory_space<vmem>>, vector<64x32xf32>
    %cst_8 = arith.constant dense<0.000000e+00> : vector<8x32xf32>
    %9 = tpu.matmul %7, %8, %cst_8 {dimension_numbers = #tpu.dot_dimension_numbers<[1], [0], [0], [1], [0, 0, 1, 1], [], []>} : vector<8x64xf32>, vector<64x32xf32>, vector<8x32xf32> -> vector<8x32xf32>
    %c0_9 = arith.constant 0 : index
    %c0_10 = arith.constant 0 : index
    %10 = vector.load %arg5[%c0_9, %c0_10] : memref<1x32xf32, #tpu.memory_space<vmem>>, vector<1x32xf32>
    %11 = vector.broadcast %10 : vector<1x32xf32> to vector<8x32xf32>
    %12 = arith.addf %9, %11 : vector<8x32xf32>
    %cst_11 = arith.constant 0.000000e+00 : f32
    %13 = vector.broadcast %cst_11 : f32 to vector<8x32xf32>
    %14 = arith.maximumf %12, %13 : vector<8x32xf32>
    %c0_12 = arith.constant 0 : index
    %c0_13 = arith.constant 0 : index
    %15 = vector.load %arg6[%c0_12, %c0_13] : memref<32x16xf32, #tpu.memory_space<vmem>>, vector<32x16xf32>
    %cst_14 = arith.constant dense<0.000000e+00> : vector<8x16xf32>
    %16 = tpu.matmul %14, %15, %cst_14 {dimension_numbers = #tpu.dot_dimension_numbers<[1], [0], [0], [1], [0, 0, 1, 1], [], []>} : vector<8x32xf32>, vector<32x16xf32>, vector<8x16xf32> -> vector<8x16xf32>
    %c0_15 = arith.constant 0 : index
    %c0_16 = arith.constant 0 : index
    %17 = vector.load %arg7[%c0_15, %c0_16] : memref<1x16xf32, #tpu.memory_space<vmem>>, vector<1x16xf32>
    %18 = vector.broadcast %17 : vector<1x16xf32> to vector<8x16xf32>
    %19 = arith.addf %16, %18 : vector<8x16xf32>
    %cst_17 = arith.constant 0.000000e+00 : f32
    %20 = vector.broadcast %cst_17 : f32 to vector<8x16xf32>
    %21 = arith.maximumf %19, %20 : vector<8x16xf32>
    %c0_18 = arith.constant 0 : index
    %c0_19 = arith.constant 0 : index
    %22 = vector.load %arg8[%c0_18, %c0_19] : memref<16x128xf32, #tpu.memory_space<vmem>>, vector<16x128xf32>
    %cst_20 = arith.constant dense<0.000000e+00> : vector<8x128xf32>
    %23 = tpu.matmul %21, %22, %cst_20 {dimension_numbers = #tpu.dot_dimension_numbers<[1], [0], [0], [1], [0, 0, 1, 1], [], []>} : vector<8x16xf32>, vector<16x128xf32>, vector<8x128xf32> -> vector<8x128xf32>
    %c0_21 = arith.constant 0 : index
    %c0_22 = arith.constant 0 : index
    %24 = vector.load %arg9[%c0_21, %c0_22] : memref<1x128xf32, #tpu.memory_space<vmem>>, vector<1x128xf32>
    %25 = vector.broadcast %24 : vector<1x128xf32> to vector<8x128xf32>
    %26 = arith.addf %23, %25 : vector<8x128xf32>
    %c0_23 = arith.constant 0 : index
    %c0_24 = arith.constant 0 : index
    %27 = vector.load %arg10[%c0_23, %c0_24] : memref<8x128xf32, #tpu.memory_space<vmem>>, vector<8x128xf32>
    tpu.vector_store %arg10[%c0_23, %c0_24], %26 {strides = array<i32>} : memref<8x128xf32, #tpu.memory_space<vmem>>, vector<8x128xf32>,
    return
  }
  func.func @transform_0(%arg0: i32) -> (i32, i32) {
    %c0_i32 = arith.constant 0 : i32
    %c0_i32_0 = arith.constant 0 : i32
    return %arg0, %c0_i32 : i32, i32
  }
  func.func @transform_1(%arg0: i32) -> (i32, i32) {
    %c0_i32 = arith.constant 0 : i32
    %c0_i32_0 = arith.constant 0 : i32
    %c0_i32_1 = arith.constant 0 : i32
    return %c0_i32, %c0_i32_0 : i32, i32
  }
  func.func @transform_2(%arg0: i32) -> (i32, i32) {
    %c0_i32 = arith.constant 0 : i32
    %c0_i32_0 = arith.constant 0 : i32
    %c0_i32_1 = arith.constant 0 : i32
    return %c0_i32, %c0_i32_0 : i32, i32
  }
  func.func @transform_3(%arg0: i32) -> (i32, i32) {
    %c0_i32 = arith.constant 0 : i32
    %c0_i32_0 = arith.constant 0 : i32
    %c0_i32_1 = arith.constant 0 : i32
    return %c0_i32, %c0_i32_0 : i32, i32
  }
  func.func @transform_4(%arg0: i32) -> (i32, i32) {
    %c0_i32 = arith.constant 0 : i32
    %c0_i32_0 = arith.constant 0 : i32
    %c0_i32_1 = arith.constant 0 : i32
    return %c0_i32, %c0_i32_0 : i32, i32
  }
  func.func @transform_5(%arg0: i32) -> (i32, i32) {
    %c0_i32 = arith.constant 0 : i32
    %c0_i32_0 = arith.constant 0 : i32
    %c0_i32_1 = arith.constant 0 : i32
    return %c0_i32, %c0_i32_0 : i32, i32
  }
  func.func @transform_6(%arg0: i32) -> (i32, i32) {
    %c0_i32 = arith.constant 0 : i32
    %c0_i32_0 = arith.constant 0 : i32
    %c0_i32_1 = arith.constant 0 : i32
    return %c0_i32, %c0_i32_0 : i32, i32
  }
  func.func @transform_7(%arg0: i32) -> (i32, i32) {
    %c0_i32 = arith.constant 0 : i32
    %c0_i32_0 = arith.constant 0 : i32
    %c0_i32_1 = arith.constant 0 : i32
    return %c0_i32, %c0_i32_0 : i32, i32
  }
  func.func @transform_8(%arg0: i32) -> (i32, i32) {
    %c0_i32 = arith.constant 0 : i32
    %c0_i32_0 = arith.constant 0 : i32
    %c0_i32_1 = arith.constant 0 : i32
    return %c0_i32, %c0_i32_0 : i32, i32
  }
  func.func @transform_9(%arg0: i32) -> (i32, i32) {
    %c0_i32 = arith.constant 0 : i32
    %c0_i32_0 = arith.constant 0 : i32
    return %arg0, %c0_i32 : i32, i32
  }
}

</mosaic_0001>

<llo_original>
// kernel: deep_mlp_forward.1
$region0: #{deep_mlp_forward.1}
  #allocation0 [shape = 'u32[]', space=smem, size = 0x4, offset = 0x4, fixed_abs, tag = 'smem constant byte address 0x4 - core index']
  #allocation1 [shape = 'u32[144,128]{1,0:T(1,128)}', space=vmem, size = 0x12000, scoped, tag = 'internal scratch']
  %s0 = inlined_call_operand.vmem [shape: f32[8,10], index: 0, kind: input, shape index: {}]
  %s1 = inlined_call_operand.vmem [shape: f32[10,64], index: 1, kind: input, shape index: {}]
  %s2 = inlined_call_operand.vmem [shape: f32[1,64], index: 2, kind: input, shape index: {}]
  %s3 = inlined_call_operand.vmem [shape: f32[64,32], index: 3, kind: input, shape index: {}]
  %s4 = inlined_call_operand.vmem [shape: f32[1,32], index: 4, kind: input, shape index: {}]
  %s5 = inlined_call_operand.vmem [shape: f32[32,16], index: 5, kind: input, shape index: {}]
  %s6 = inlined_call_operand.vmem [shape: f32[1,16], index: 6, kind: input, shape index: {}]
  %s7 = inlined_call_operand.vmem [shape: f32[16,128], index: 7, kind: input, shape index: {}]
  %s8 = inlined_call_operand.vmem [shape: f32[1,128], index: 8, kind: input, shape index: {}]
  %s9 = inlined_call_operand.vmem [shape: f32[8,128], index: 9, kind: output, shape index: {}]
  %s10 = sld [smem:[#allocation0]]
  $region46: #{deep_mlp_forward.1} parent=0
    _
  %s12 = ssub.s32 1, %s10
  %s13 = scalar_select 0, %s12, %s10
  // Predicated region
  $region2: #{deep_mlp_forward.1} parent=0 // pred_check
    _
  $region3: #{deep_mlp_forward.1} parent=0 // pred_check_branch
    %15 = sbr.rel (0) target = $region5
  $region4: #{deep_mlp_forward.1} parent=0 // pred_region
    _
  $region5: #{deep_mlp_forward.1} parent=0 // pred_fallthru
    _
  // Predicated region
  $region6: #{deep_mlp_forward.1} parent=0 // pred_check
    _
  $region7: #{deep_mlp_forward.1} parent=0 // pred_check_branch
    %17 = sbr.rel (0) target = $region9
  $region8: #{deep_mlp_forward.1} parent=0 // pred_region
    _
  $region9: #{deep_mlp_forward.1} parent=0 // pred_fallthru
    _
  // Predicated region
  $region10: #{deep_mlp_forward.1} parent=0 // pred_check
    _
  $region11: #{deep_mlp_forward.1} parent=0 // pred_check_branch
    %19 = sbr.rel (0) target = $region13
  $region12: #{deep_mlp_forward.1} parent=0 // pred_region
    _
  $region13: #{deep_mlp_forward.1} parent=0 // pred_fallthru
    _
  // Predicated region
  $region14: #{deep_mlp_forward.1} parent=0 // pred_check
    _
  $region15: #{deep_mlp_forward.1} parent=0 // pred_check_branch
    %21 = sbr.rel (0) target = $region17
  $region16: #{deep_mlp_forward.1} parent=0 // pred_region
    _
  $region17: #{deep_mlp_forward.1} parent=0 // pred_fallthru
    _
  // Predicated region
  $region18: #{deep_mlp_forward.1} parent=0 // pred_check
    _
  $region19: #{deep_mlp_forward.1} parent=0 // pred_check_branch
    %23 = sbr.rel (0) target = $region21
  $region20: #{deep_mlp_forward.1} parent=0 // pred_region
    _
  $region21: #{deep_mlp_forward.1} parent=0 // pred_fallthru
    _
  // Predicated region
  $region22: #{deep_mlp_forward.1} parent=0 // pred_check
    _
  $region23: #{deep_mlp_forward.1} parent=0 // pred_check_branch
    %25 = sbr.rel (0) target = $region25
  $region24: #{deep_mlp_forward.1} parent=0 // pred_region
    _
  $region25: #{deep_mlp_forward.1} parent=0 // pred_fallthru
    _
  // Predicated region
  $region26: #{deep_mlp_forward.1} parent=0 // pred_check
    _
  $region27: #{deep_mlp_forward.1} parent=0 // pred_check_branch
    %27 = sbr.rel (0) target = $region29
  $region28: #{deep_mlp_forward.1} parent=0 // pred_region
    _
  $region29: #{deep_mlp_forward.1} parent=0 // pred_fallthru
    _
  // Predicated region
  $region30: #{deep_mlp_forward.1} parent=0 // pred_check
    _
  $region31: #{deep_mlp_forward.1} parent=0 // pred_check_branch
    %29 = sbr.rel (0) target = $region33
  $region32: #{deep_mlp_forward.1} parent=0 // pred_region
    _
  $region33: #{deep_mlp_forward.1} parent=0 // pred_fallthru
    _
  // Predicated region
  $region34: #{deep_mlp_forward.1} parent=0 // pred_check
    _
  $region35: #{deep_mlp_forward.1} parent=0 // pred_check_branch
    %31 = sbr.rel (0) target = $region37
  $region36: #{deep_mlp_forward.1} parent=0 // pred_region
    _
  $region37: #{deep_mlp_forward.1} parent=0 // pred_fallthru
    _
  %v32 = vld [vmem:[%s0] sm:$0xff]
  %v33 = vld [vmem:[%s1] sm:$0xff]
  %v34 = vld [vmem:[%s1 + $0x8] sm:$0x3]
  %v35 = vld [vmem:[%s2] sm:$0x1]
  %v37 = vlaneseq
  %v38 = vshrl.u32 %v37, 7
  %v39 = vsub.s32 0, %v38
  %v40 = vrot.slane %v35, %v39
  %vm42 = vcmask 80896
  %v44 = vsel %vm42, %v32, 0
  %vm46 = vcmask 1041408
  %v48 = vsel %vm46, %v34, 0
  %50 = vmatprep.subr.mxu0 0.0
  %51 = vmatpush1.msra.mxu0 0.0
  %52 = vmatprep.subr.mxu0 0.0
  %53 = vmatpush1.msra.mxu0 0.0
  %54 = vmatprep.subr.mxu0 0.0
  %55 = vmatpush1.msra.mxu0 0.0
  %56 = vmatprep.subr.mxu0 0.0
  %57 = vmatpush1.msra.mxu0 0.0
  %58 = vmatprep.subr.mxu0 0.0
  %59 = vmatpush1.msra.mxu0 0.0
  %60 = vmatprep.subr.mxu0 0.0
  %61 = vmatpush1.msra.mxu0 0.0
  %62 = vmatprep.subr.mxu0 0.0
  %63 = vmatpush1.msra.mxu0 0.0
  %64 = vmatprep.subr.mxu0 0.0
  %65 = vmatpush1.msra.mxu0 0.0
  %66 = vmatprep.subr.mxu0 0.0
  %67 = vmatpush1.msra.mxu0 0.0
  %68 = vmatprep.subr.mxu0 0.0
  %69 = vmatpush1.msra.mxu0 0.0
  %70 = vmatprep.subr.mxu0 0.0
  %71 = vmatpush1.msra.mxu0 0.0
  %72 = vmatprep.subr.mxu0 0.0
  %73 = vmatpush1.msra.mxu0 0.0
  %74 = vmatprep.subr.mxu0 0.0
  %75 = vmatpush1.msra.mxu0 0.0
  %76 = vmatprep.subr.mxu0 0.0
  %77 = vmatpush1.msra.mxu0 0.0
  %78 = vmatprep.subr.mxu0 0.0
  %79 = vmatpush1.msra.mxu0 %v48
  %80 = vmatprep.subr.mxu0 0.0
  %81 = vmatpush1.msra.mxu0 %v33
  %82 = vmatprep.subr.mxu0 0.0
  %83 = vmatpush2.msra.mxu0 0.0
  %84 = vmatprep.subr.mxu0 0.0
  %85 = vmatpush2.msra.mxu0 0.0
  %86 = vmatprep.subr.mxu0 0.0
  %87 = vmatpush2.msra.mxu0 0.0
  %88 = vmatprep.subr.mxu0 0.0
  %89 = vmatpush2.msra.mxu0 0.0
  %90 = vmatprep.subr.mxu0 0.0
  %91 = vmatpush2.msra.mxu0 0.0
  %92 = vmatprep.subr.mxu0 0.0
  %93 = vmatpush2.msra.mxu0 0.0
  %94 = vmatprep.subr.mxu0 0.0
  %95 = vmatpush2.msra.mxu0 0.0
  %96 = vmatprep.subr.mxu0 0.0
  %97 = vmatpush2.msra.mxu0 0.0
  %98 = vmatprep.subr.mxu0 0.0
  %99 = vmatpush2.msra.mxu0 0.0
  %100 = vmatprep.subr.mxu0 0.0
  %101 = vmatpush2.msra.mxu0 0.0
  %102 = vmatprep.subr.mxu0 0.0
  %103 = vmatpush2.msra.mxu0 0.0
  %104 = vmatprep.subr.mxu0 0.0
  %105 = vmatpush2.msra.mxu0 0.0
  %106 = vmatprep.subr.mxu0 0.0
  %107 = vmatpush2.msra.mxu0 0.0
  %108 = vmatprep.subr.mxu0 0.0
  %109 = vmatpush2.msra.mxu0 0.0
  %110 = vmatprep.subr.mxu0 0.0
  %111 = vmatpush2.msra.mxu0 0.0
  %112 = vmatprep.subr.mxu0 0.0
  %113 = vmatpush2.msra.mxu0 0.0
  %114 = vmatprep.mubr.f32.mxu0 0.0
  %115 = vmatmul.mubr.f32.gmra.mxu0 %v44
  %v116 = vpop.f32.mrf.mxu0
  %v117 = vadd.f32 %v40, %v116
  %v118 = vpop.f32.mrf.mxu0
  %119 = vdwg.mxu0
  %v120 = vmax.f32 %v117, 0.0
  %v121 = vld [vmem:[%s3] sm:$0xff]
  %v122 = vld [vmem:[%s3 + $0x8] sm:$0xff]
  %v123 = vld [vmem:[%s3 + $0x10] sm:$0xff]
  %v124 = vld [vmem:[%s3 + $0x18] sm:$0xff]
  %v125 = vld [vmem:[%s3 + $0x20] sm:$0xff]
  %v126 = vld [vmem:[%s3 + $0x28] sm:$0xff]
  %v127 = vld [vmem:[%s3 + $0x30] sm:$0xff]
  %v128 = vld [vmem:[%s3 + $0x38] sm:$0xff]
  %v129 = vld [vmem:[%s4] sm:$0x1]
  %v131 = vlaneseq
  %v132 = vshrl.u32 %v131, 7
  %v133 = vsub.s32 0, %v132
  %v134 = vrot.slane %v129, %v133
  %vm136 = vcmask 523264
  %v138 = vsel %vm136, %v120, 0
  %140 = vmatprep.subr.mxu0 0.0
  %141 = vmatpush1.msra.mxu0 0.0
  %142 = vmatprep.subr.mxu0 0.0
  %143 = vmatpush1.msra.mxu0 0.0
  %144 = vmatprep.subr.mxu0 0.0
  %145 = vmatpush1.msra.mxu0 0.0
  %146 = vmatprep.subr.mxu0 0.0
  %147 = vmatpush1.msra.mxu0 0.0
  %148 = vmatprep.subr.mxu0 0.0
  %149 = vmatpush1.msra.mxu0 0.0
  %150 = vmatprep.subr.mxu0 0.0
  %151 = vmatpush1.msra.mxu0 0.0
  %152 = vmatprep.subr.mxu0 0.0
  %153 = vmatpush1.msra.mxu0 0.0
  %154 = vmatprep.subr.mxu0 0.0
  %155 = vmatpush1.msra.mxu0 0.0
  %156 = vmatprep.subr.mxu0 0.0
  %157 = vmatpush1.msra.mxu0 %v128
  %158 = vmatprep.subr.mxu0 0.0
  %159 = vmatpush1.msra.mxu0 %v127
  %160 = vmatprep.subr.mxu0 0.0
  %161 = vmatpush1.msra.mxu0 %v126
  %162 = vmatprep.subr.mxu0 0.0
  %163 = vmatpush1.msra.mxu0 %v125
  %164 = vmatprep.subr.mxu0 0.0
  %165 = vmatpush1.msra.mxu0 %v124
  %166 = vmatprep.subr.mxu0 0.0
  %167 = vmatpush1.msra.mxu0 %v123
  %168 = vmatprep.subr.mxu0 0.0
  %169 = vmatpush1.msra.mxu0 %v122
  %170 = vmatprep.subr.mxu0 0.0
  %171 = vmatpush1.msra.mxu0 %v121
  %172 = vmatprep.subr.mxu0 0.0
  %173 = vmatpush2.msra.mxu0 0.0
  %174 = vmatprep.subr.mxu0 0.0
  %175 = vmatpush2.msra.mxu0 0.0
  %176 = vmatprep.subr.mxu0 0.0
  %177 = vmatpush2.msra.mxu0 0.0
  %178 = vmatprep.subr.mxu0 0.0
  %179 = vmatpush2.msra.mxu0 0.0
  %180 = vmatprep.subr.mxu0 0.0
  %181 = vmatpush2.msra.mxu0 0.0
  %182 = vmatprep.subr.mxu0 0.0
  %183 = vmatpush2.msra.mxu0 0.0
  %184 = vmatprep.subr.mxu0 0.0
  %185 = vmatpush2.msra.mxu0 0.0
  %186 = vmatprep.subr.mxu0 0.0
  %187 = vmatpush2.msra.mxu0 0.0
  %188 = vmatprep.subr.mxu0 0.0
  %189 = vmatpush2.msra.mxu0 0.0
  %190 = vmatprep.subr.mxu0 0.0
  %191 = vmatpush2.msra.mxu0 0.0
  %192 = vmatprep.subr.mxu0 0.0
  %193 = vmatpush2.msra.mxu0 0.0
  %194 = vmatprep.subr.mxu0 0.0
  %195 = vmatpush2.msra.mxu0 0.0
  %196 = vmatprep.subr.mxu0 0.0
  %197 = vmatpush2.msra.mxu0 0.0
  %198 = vmatprep.subr.mxu0 0.0
  %199 = vmatpush2.msra.mxu0 0.0
  %200 = vmatprep.subr.mxu0 0.0
  %201 = vmatpush2.msra.mxu0 0.0
  %202 = vmatprep.subr.mxu0 0.0
  %203 = vmatpush2.msra.mxu0 0.0
  %204 = vmatprep.mubr.f32.mxu0 0.0
  %205 = vmatmul.mubr.f32.gmra.mxu0 %v138
  %v206 = vpop.f32.mrf.mxu0
  %v207 = vadd.f32 %v134, %v206
  %v208 = vpop.f32.mrf.mxu0
  %209 = vdwg.mxu0
  %v210 = vmax.f32 %v207, 0.0
  %v211 = vld [vmem:[%s5] sm:$0xff]
  %v212 = vld [vmem:[%s5 + $0x8] sm:$0xff]
  %v213 = vld [vmem:[%s5 + $0x10] sm:$0xff]
  %v214 = vld [vmem:[%s5 + $0x18] sm:$0xff]
  %v215 = vld [vmem:[%s6] sm:$0x1]
  %v217 = vlaneseq
  %v218 = vshrl.u32 %v217, 7
  %v219 = vsub.s32 0, %v218
  %v220 = vrot.slane %v215, %v219
  %vm222 = vcmask 261120
  %v224 = vsel %vm222, %v210, 0
  %226 = vmatprep.subr.mxu0 0.0
  %227 = vmatpush1.msra.mxu0 0.0
  %228 = vmatprep.subr.mxu0 0.0
  %229 = vmatpush1.msra.mxu0 0.0
  %230 = vmatprep.subr.mxu0 0.0
  %231 = vmatpush1.msra.mxu0 0.0
  %232 = vmatprep.subr.mxu0 0.0
  %233 = vmatpush1.msra.mxu0 0.0
  %234 = vmatprep.subr.mxu0 0.0
  %235 = vmatpush1.msra.mxu0 0.0
  %236 = vmatprep.subr.mxu0 0.0
  %237 = vmatpush1.msra.mxu0 0.0
  %238 = vmatprep.subr.mxu0 0.0
  %239 = vmatpush1.msra.mxu0 0.0
  %240 = vmatprep.subr.mxu0 0.0
  %241 = vmatpush1.msra.mxu0 0.0
  %242 = vmatprep.subr.mxu0 0.0
  %243 = vmatpush1.msra.mxu0 0.0
  %244 = vmatprep.subr.mxu0 0.0
  %245 = vmatpush1.msra.mxu0 0.0
  %246 = vmatprep.subr.mxu0 0.0
  %247 = vmatpush1.msra.mxu0 0.0
  %248 = vmatprep.subr.mxu0 0.0
  %249 = vmatpush1.msra.mxu0 0.0
  %250 = vmatprep.subr.mxu0 0.0
  %251 = vmatpush1.msra.mxu0 %v214
  %252 = vmatprep.subr.mxu0 0.0
  %253 = vmatpush1.msra.mxu0 %v213
  %254 = vmatprep.subr.mxu0 0.0
  %255 = vmatpush1.msra.mxu0 %v212
  %256 = vmatprep.subr.mxu0 0.0
  %257 = vmatpush1.msra.mxu0 %v211
  %258 = vmatprep.subr.mxu0 0.0
  %259 = vmatpush2.msra.mxu0 0.0
  %260 = vmatprep.subr.mxu0 0.0
  %261 = vmatpush2.msra.mxu0 0.0
  %262 = vmatprep.subr.mxu0 0.0
  %263 = vmatpush2.msra.mxu0 0.0
  %264 = vmatprep.subr.mxu0 0.0
  %265 = vmatpush2.msra.mxu0 0.0
  %266 = vmatprep.subr.mxu0 0.0
  %267 = vmatpush2.msra.mxu0 0.0
  %268 = vmatprep.subr.mxu0 0.0
  %269 = vmatpush2.msra.mxu0 0.0
  %270 = vmatprep.subr.mxu0 0.0
  %271 = vmatpush2.msra.mxu0 0.0
  %272 = vmatprep.subr.mxu0 0.0
  %273 = vmatpush2.msra.mxu0 0.0
  %274 = vmatprep.subr.mxu0 0.0
  %275 = vmatpush2.msra.mxu0 0.0
  %276 = vmatprep.subr.mxu0 0.0
  %277 = vmatpush2.msra.mxu0 0.0
  %278 = vmatprep.subr.mxu0 0.0
  %279 = vmatpush2.msra.mxu0 0.0
  %280 = vmatprep.subr.mxu0 0.0
  %281 = vmatpush2.msra.mxu0 0.0
  %282 = vmatprep.subr.mxu0 0.0
  %283 = vmatpush2.msra.mxu0 0.0
  %284 = vmatprep.subr.mxu0 0.0
  %285 = vmatpush2.msra.mxu0 0.0
  %286 = vmatprep.subr.mxu0 0.0
  %287 = vmatpush2.msra.mxu0 0.0
  %288 = vmatprep.subr.mxu0 0.0
  %289 = vmatpush2.msra.mxu0 0.0
  %290 = vmatprep.mubr.f32.mxu0 0.0
  %291 = vmatmul.mubr.f32.gmra.mxu0 %v224
  %v292 = vpop.f32.mrf.mxu0
  %v293 = vadd.f32 %v220, %v292
  %v294 = vpop.f32.mrf.mxu0
  %295 = vdwg.mxu0
  %v296 = vmax.f32 %v293, 0.0
  %v297 = vld [vmem:[%s7] sm:$0xff]
  %v298 = vld [vmem:[%s7 + $0x8] sm:$0xff]
  %v299 = vld [vmem:[%s8] sm:$0x1]
  %v301 = vlaneseq
  %v302 = vshrl.u32 %v301, 7
  %v303 = vsub.s32 0, %v302
  %v304 = vrot.slane %v299, %v303
  %vm306 = vcmask 130048
  %v308 = vsel %vm306, %v296, 0
  %310 = vmatprep.subr.mxu0 0.0
  %311 = vmatpush1.msra.mxu0 0.0
  %312 = vmatprep.subr.mxu0 0.0
  %313 = vmatpush1.msra.mxu0 0.0
  %314 = vmatprep.subr.mxu0 0.0
  %315 = vmatpush1.msra.mxu0 0.0
  %316 = vmatprep.subr.mxu0 0.0
  %317 = vmatpush1.msra.mxu0 0.0
  %318 = vmatprep.subr.mxu0 0.0
  %319 = vmatpush1.msra.mxu0 0.0
  %320 = vmatprep.subr.mxu0 0.0
  %321 = vmatpush1.msra.mxu0 0.0
  %322 = vmatprep.subr.mxu0 0.0
  %323 = vmatpush1.msra.mxu0 0.0
  %324 = vmatprep.subr.mxu0 0.0
  %325 = vmatpush1.msra.mxu0 0.0
  %326 = vmatprep.subr.mxu0 0.0
  %327 = vmatpush1.msra.mxu0 0.0
  %328 = vmatprep.subr.mxu0 0.0
  %329 = vmatpush1.msra.mxu0 0.0
  %330 = vmatprep.subr.mxu0 0.0
  %331 = vmatpush1.msra.mxu0 0.0
  %332 = vmatprep.subr.mxu0 0.0
  %333 = vmatpush1.msra.mxu0 0.0
  %334 = vmatprep.subr.mxu0 0.0
  %335 = vmatpush1.msra.mxu0 0.0
  %336 = vmatprep.subr.mxu0 0.0
  %337 = vmatpush1.msra.mxu0 0.0
  %338 = vmatprep.subr.mxu0 0.0
  %339 = vmatpush1.msra.mxu0 %v298
  %340 = vmatprep.subr.mxu0 0.0
  %341 = vmatpush1.msra.mxu0 %v297
  %342 = vmatprep.subr.mxu0 0.0
  %343 = vmatpush2.msra.mxu0 0.0
  %344 = vmatprep.subr.mxu0 0.0
  %345 = vmatpush2.msra.mxu0 0.0
  %346 = vmatprep.subr.mxu0 0.0
  %347 = vmatpush2.msra.mxu0 0.0
  %348 = vmatprep.subr.mxu0 0.0
  %349 = vmatpush2.msra.mxu0 0.0
  %350 = vmatprep.subr.mxu0 0.0
  %351 = vmatpush2.msra.mxu0 0.0
  %352 = vmatprep.subr.mxu0 0.0
  %353 = vmatpush2.msra.mxu0 0.0
  %354 = vmatprep.subr.mxu0 0.0
  %355 = vmatpush2.msra.mxu0 0.0
  %356 = vmatprep.subr.mxu0 0.0
  %357 = vmatpush2.msra.mxu0 0.0
  %358 = vmatprep.subr.mxu0 0.0
  %359 = vmatpush2.msra.mxu0 0.0
  %360 = vmatprep.subr.mxu0 0.0
  %361 = vmatpush2.msra.mxu0 0.0
  %362 = vmatprep.subr.mxu0 0.0
  %363 = vmatpush2.msra.mxu0 0.0
  %364 = vmatprep.subr.mxu0 0.0
  %365 = vmatpush2.msra.mxu0 0.0
  %366 = vmatprep.subr.mxu0 0.0
  %367 = vmatpush2.msra.mxu0 0.0
  %368 = vmatprep.subr.mxu0 0.0
  %369 = vmatpush2.msra.mxu0 0.0
  %370 = vmatprep.subr.mxu0 0.0
  %371 = vmatpush2.msra.mxu0 0.0
  %372 = vmatprep.subr.mxu0 0.0
  %373 = vmatpush2.msra.mxu0 0.0
  %374 = vmatprep.mubr.f32.mxu0 0.0
  %375 = vmatmul.mubr.f32.gmra.mxu0 %v308
  %v376 = vpop.f32.mrf.mxu0
  %v377 = vadd.f32 %v304, %v376
  %v378 = vpop.f32.mrf.mxu0
  %379 = vdwg.mxu0
  %380 = vst [vmem:[%s9] sm:$0xff] %v377
  // Predicated region
  $region38: #{deep_mlp_forward.1} parent=0 // pred_check
    _
  $region39: #{deep_mlp_forward.1} parent=0 // pred_check_branch
    %382 = sbr.rel (0) target = $region41
  $region40: #{deep_mlp_forward.1} parent=0 // pred_region
    _
  $region41: #{deep_mlp_forward.1} parent=0 // pred_fallthru
    _
  // Predicated region
  $region42: #{deep_mlp_forward.1} parent=0 // pred_check
    _
  $region43: #{deep_mlp_forward.1} parent=0 // pred_check_branch
    %384 = sbr.rel (0) target = $region45
  $region44: #{deep_mlp_forward.1} parent=0 // pred_region
    _
  $region45: #{deep_mlp_forward.1} parent=0 // pred_fallthru
    _

</llo_original>
